<compile_context>
chip_gen: v5e
topology: v5e:2x2
jax: 0.10.0
libtpu: 0.0.40
codegen_flags: <defaults>
</compile_context>

<pallas_src>
import functools

import jax
import jax.numpy as jnp
from jax.experimental import pallas as pl
from jax.experimental.pallas import tpu as pltpu


def _diversity_kernel(n_valid, needs_mask, x_ref, out_ref):
    """One grid step: partial sum of pairwise prediction agreement for one tile.

    x_ref  : (M, TN, C) logits tile in VMEM (samples on sublanes, classes on lanes)
    out_ref: (1, 8, 128) per-tile partial sum (scalar replicated across the block
             so the store is a plain (8,128)-aligned vst).
    """
    tile_n = x_ref.shape[1]

    x = x_ref[...]                                     # keep input dtype (bf16 stays bf16)

    # Numerically-stable softmax over classes (lane axis).  max / sub / exp run in
    # the input dtype (bf16 VPU/EUP on v6e/v7x); everything after accumulates in f32.
    x_max = jnp.max(x, axis=-1, keepdims=True)         # (M, TN, 1)   XLU
    e = jnp.exp(x - x_max)                             # (M, TN, C)   EUP
    ef = e.astype(jnp.float32)
    denom = jnp.sum(ef, axis=-1, keepdims=True)        # (M, TN, 1)
    p = ef * pl.reciprocal(denom, approx=True)         # (M, TN, C)   f32 probabilities

    # Pairwise agreement per sample (row):
    #   sum_{m<m'} <p_m, p_m'> = 0.5 * ( ||sum_m p_m||^2 - sum_m ||p_m||^2 )
    s = jnp.sum(p, axis=0)                                             # (TN, C)
    total_sq = jnp.sum(s * s, axis=-1, keepdims=True)                  # (TN, 1)
    self_sq = jnp.sum(jnp.sum(p * p, axis=0), axis=-1, keepdims=True)  # (TN, 1)
    pair = 0.5 * (total_sq - self_sq)                                  # (TN, 1)

    if needs_mask:
        # Only a partial last tile can contain out-of-range sample rows; their
        # contents are undefined (no jnp.pad pass), so mask with a select (never a
        # multiply) so NaN/Inf garbage cannot leak into the sum.
        i = pl.program_id(0)
        row = i * tile_n + jax.lax.broadcasted_iota(jnp.int32, (tile_n, 1), 0)
        pair = jnp.where(row < n_valid, pair, 0.0)

    out_ref[...] = jnp.full(out_ref.shape, jnp.sum(pair), dtype=jnp.float32)


def _choose_tile_n(M, C, N, in_itemsize, budget_bytes=16 << 20):
    """Largest sublane-aligned sample tile that keeps the working set under budget.

    Per sample column: double-buffered input block (classes lane-padded to 128 in
    VMEM) plus ~6 f32 full-tile temporaries (e, ef, p, p*p, s, slack).  The 16 MiB
    budget leaves >=25% headroom under the 48 MiB scoped limit and is safe on v7x's
    64 MiB physical VMEM; typical DomainBed problems fit in a single grid step.
    """
    c_lane = -(-C // 128) * 128
    per_col = 2 * M * c_lane * in_itemsize + 6 * M * c_lane * 4
    max_cols = max(8, (budget_bytes // per_col) // 8 * 8)
    if N <= max_cols:
        return N, 1, False                 # whole problem in one block, no mask
    tile_n = max_cols                      # multiple of 8 (sublane constraint)
    num_tiles = -(-N // tile_n)
    return tile_n, num_tiles, (N % tile_n) != 0


@jax.jit
def diversity_loss(logits, losses=None, classifiers=None):
    """logits: (M, E, B, C); returns scalar mean pairwise prediction agreement."""
    del losses, classifiers  # TODO(synk): unused — base class does not define their role.
    M, E, B, C = logits.shape
    N = E * B

    # Free reshape of contiguous dims — no transpose or pad HBM passes.
    x = logits.reshape(M, N, C)

    tile_n, num_tiles, needs_mask = _choose_tile_n(M, C, N, x.dtype.itemsize)
    kernel = functools.partial(_diversity_kernel, N, needs_mask)

    cost = pl.CostEstimate(
        flops=8 * M * N * C,
        transcendentals=M * N * C,
        bytes_accessed=M * N * C * x.dtype.itemsize + num_tiles * 8 * 128 * 4,
    )

    partials = pl.pallas_call(
        kernel,
        out_shape=jax.ShapeDtypeStruct((num_tiles, 8, 128), jnp.float32),
        grid_spec=pltpu.PrefetchScalarGridSpec(
            num_scalar_prefetch=0,
            grid=(num_tiles,),
            in_specs=[pl.BlockSpec((M, tile_n, C), lambda i: (0, i, 0))],
            out_specs=pl.BlockSpec((1, 8, 128), lambda i: (i, 0, 0)),
        ),
        compiler_params=pltpu.CompilerParams(
            dimension_semantics=("parallel",),   # no carried state -> megacore-friendly
            vmem_limit_bytes=48 << 20,
        ),
        cost_estimate=cost,
    )(x)

    num_pairs = M * (M - 1) // 2
    # Mean over member pairs and over (env, batch) samples.
    return jnp.sum(partials[:, 0, 0]) / jnp.float32(max(num_pairs, 1) * N)


def _reference(logits):
    """Pure-JAX reference for validation."""
    M, E, B, C = logits.shape
    p = jax.nn.softmax(logits.astype(jnp.float32), axis=-1).reshape(M, E * B, C)
    gram = jnp.einsum("mnc,knc->mkn", p, p)                   # (M, M, N)
    iu = jnp.triu(jnp.ones((M, M), jnp.float32), k=1)[:, :, None]
    num_pairs = M * (M - 1) // 2
    return jnp.sum(gram * iu) / (max(num_pairs, 1) * E * B)


if __name__ == "__main__":
    key = jax.random.PRNGKey(0)
    k1, k2 = jax.random.split(key)

    num_members, num_envs, bsize, num_classes = 3, 2, 8, 16
    logits = jax.random.normal(
        k1, (num_members, num_envs, bsize, num_classes), dtype=jnp.float32
    )
    losses = jax.random.uniform(
        k2, (num_members, num_envs, bsize), dtype=jnp.float32
    )

    out = diversity_loss(logits, losses)
    out = jax.block_until_ready(out)

    ref = _reference(logits)
    # approx=True reciprocal introduces ~1e-3 relative error in the softmax denom.
    assert jnp.allclose(out, ref, atol=1e-4, rtol=5e-3), (out, ref)

    print("KERNEL_OK")
</pallas_src>

<mosaic_0001>
module attributes {stable_mosaic.version = 11 : i64} {
  func.func @_diversity_kernel(%arg0: i32, %arg1: memref<3x16x16xf32, #tpu.memory_space<vmem>>, %arg2: memref<1x8x128xf32, #tpu.memory_space<vmem>>) attributes {dimension_semantics = [#tpu.dimension_semantics<parallel>], iteration_bounds = array<i64: 1>, scalar_prefetch = 0 : i64, scratch_operands = 0 : i64, tpu.core_type = #tpu.core_type<tc>, window_params = [{transform_indices = @transform_0, window_bounds = array<i64: 3, 16, 16>}, {transform_indices = @transform_1, window_bounds = array<i64: 1, 8, 128>}]} {
    %c0 = arith.constant 0 : index
    %c0_0 = arith.constant 0 : index
    %c0_1 = arith.constant 0 : index
    %0 = vector.load %arg1[%c0, %c0_0, %c0_1] : memref<3x16x16xf32, #tpu.memory_space<vmem>>, vector<3x16x16xf32>
    %cst = arith.constant dense<0xFF800000> : vector<3x16xf32>
    %1 = vector.multi_reduction <maximumf>, %0, %cst [2] : vector<3x16x16xf32> to vector<3x16xf32>
    %2 = vector.shape_cast %1 : vector<3x16xf32> to vector<3x16x1xf32>
    %3 = vector.broadcast %2 : vector<3x16x1xf32> to vector<3x16x16xf32>
    %4 = arith.subf %0, %3 : vector<3x16x16xf32>
    %5 = math.exp %4 : vector<3x16x16xf32>
    %cst_2 = arith.constant dense<0.000000e+00> : vector<3x16xf32>
    %6 = vector.multi_reduction <add>, %5, %cst_2 [2] : vector<3x16x16xf32> to vector<3x16xf32>
    %7 = vector.shape_cast %6 : vector<3x16xf32> to vector<3x16x1xf32>
    %8 = tpu.reciprocal %7 {approx = true} : vector<3x16x1xf32> -> vector<3x16x1xf32>
    %9 = vector.broadcast %8 : vector<3x16x1xf32> to vector<3x16x16xf32>
    %10 = arith.mulf %5, %9 : vector<3x16x16xf32>
    %cst_3 = arith.constant dense<0.000000e+00> : vector<16x16xf32>
    %11 = vector.multi_reduction <add>, %10, %cst_3 [0] : vector<3x16x16xf32> to vector<16x16xf32>
    %12 = arith.mulf %11, %11 : vector<16x16xf32>
    %cst_4 = arith.constant dense<0.000000e+00> : vector<16xf32>
    %13 = vector.multi_reduction <add>, %12, %cst_4 [1] : vector<16x16xf32> to vector<16xf32>
    %14 = vector.shape_cast %13 : vector<16xf32> to vector<16x1xf32>
    %15 = arith.mulf %10, %10 : vector<3x16x16xf32>
    %cst_5 = arith.constant dense<0.000000e+00> : vector<16x16xf32>
    %16 = vector.multi_reduction <add>, %15, %cst_5 [0] : vector<3x16x16xf32> to vector<16x16xf32>
    %cst_6 = arith.constant dense<0.000000e+00> : vector<16xf32>
    %17 = vector.multi_reduction <add>, %16, %cst_6 [1] : vector<16x16xf32> to vector<16xf32>
    %18 = vector.shape_cast %17 : vector<16xf32> to vector<16x1xf32>
    %19 = arith.subf %14, %18 : vector<16x1xf32>
    %cst_7 = arith.constant 5.000000e-01 : f32
    %20 = vector.broadcast %cst_7 : f32 to vector<16x1xf32>
    %21 = arith.mulf %20, %19 : vector<16x1xf32>
    %22 = vector.shape_cast %21 : vector<16x1xf32> to vector<1x16x1xf32>
    %cst_8 = arith.constant dense<0.000000e+00> : vector<1xf32>
    %23 = vector.multi_reduction <add>, %22, %cst_8 [1, 2] : vector<1x16x1xf32> to vector<1xf32>
    %24 = vector.shape_cast %23 : vector<1xf32> to vector<1x1x1xf32>
    %25 = vector.extract %24[0, 0, 0] : f32 from vector<1x1x1xf32>
    %26 = vector.broadcast %25 : f32 to vector<1x8x128xf32>
    %c0_9 = arith.constant 0 : index
    %c0_10 = arith.constant 0 : index
    %c0_11 = arith.constant 0 : index
    %27 = vector.load %arg2[%c0_9, %c0_10, %c0_11] : memref<1x8x128xf32, #tpu.memory_space<vmem>>, vector<1x8x128xf32>
    tpu.vector_store %arg2[%c0_9, %c0_10, %c0_11], %26 {strides = array<i32>} : memref<1x8x128xf32, #tpu.memory_space<vmem>>, vector<1x8x128xf32>,
    return
  }
  func.func @transform_0(%arg0: i32) -> (i32, i32, i32) {
    %c0_i32 = arith.constant 0 : i32
    %c0_i32_0 = arith.constant 0 : i32
    %c0_i32_1 = arith.constant 0 : i32
    return %c0_i32, %arg0, %c0_i32_0 : i32, i32, i32
  }
  func.func @transform_1(%arg0: i32) -> (i32, i32, i32) {
    %c0_i32 = arith.constant 0 : i32
    %c0_i32_0 = arith.constant 0 : i32
    %c0_i32_1 = arith.constant 0 : i32
    return %arg0, %c0_i32, %c0_i32_0 : i32, i32, i32
  }
}

</mosaic_0001>

<llo_original>
// kernel: diversity_loss.1
$region0: #{diversity_loss.1}
  #allocation0 [shape = 'u32[]', space=smem, size = 0x4, offset = 0x4, fixed_abs, tag = 'smem constant byte address 0x4 - core index']
  #allocation1 [shape = 'u32[72,128]{1,0:T(1,128)}', space=vmem, size = 0x9000, scoped, tag = 'internal scratch']
  %s0 = inlined_call_operand.hbm [shape: f32[3,16,16], index: 0, kind: input, shape index: {}]
  %s1 = inlined_call_operand.vmem [shape: f32[1,8,128], index: 1, kind: output, shape index: {}]
  %s2 = sld [smem:[#allocation0]]
  $region18: #{diversity_loss.1} parent=0
    _
  %s4 = ssub.s32 1, %s2
  %s5 = scalar_select 0, %s4, %s2
  $region1: #{diversity_loss.1} parent=0
    #allocation2 [shape = 'u8[24576]{0}', space=vmem, size = 0x6000, scoped, tag = 'input window, operand 0, single buffered']
    #allocation3 [shape = 's32[1]{0}', space=sflag, size = 0x4, scoped, tag = 'scoped memory for diversity_loss.1']
    %6 = vsyncpa [#allocation3], 0
    // Predicated region
    $region2: #{diversity_loss.1} parent=1 // pred_check
      _
    $region3: #{diversity_loss.1} parent=1 // pred_check_branch
      %8 = sbr.rel (0) target = $region5
    $region4: #{diversity_loss.1} parent=1 // pred_region
      %10 = vsyncadd [#allocation3], 0
      %s11 = sshll.u32 %s0, 4
      %s12 = int_to_ptr.hbm [resolvable:$true] %s11
      %s13 = sshll.u32 [#allocation2], 4
      %s14 = int_to_ptr.vmem [resolvable:$true] %s13
      %19 = dma.hbm_to_vmem [thread:$0]  %s12, 768, %s14, [#allocation3], 128, 128, 8
    $region5: #{diversity_loss.1} parent=1 // pred_fallthru
      _
    // Predicated region
    $region6: #{diversity_loss.1} parent=1 // pred_check
      _
    $region7: #{diversity_loss.1} parent=1 // pred_check_branch
      %21 = sbr.rel (0) target = $region9
    $region8: #{diversity_loss.1} parent=1 // pred_region
      %23 = dma.done [#allocation3], 768
    $region9: #{diversity_loss.1} parent=1 // pred_fallthru
      _
    %v24 = vld [vmem:[#allocation2] sm:$0xff]
    %v25 = vld [vmem:[#allocation2 + $0x8] sm:$0xff]
    %v26 = vld [vmem:[#allocation2 + $0x10] sm:$0xff]
    %v27 = vld [vmem:[#allocation2 + $0x18] sm:$0xff]
    %v28 = vld [vmem:[#allocation2 + $0x20] sm:$0xff]
    %v29 = vld [vmem:[#allocation2 + $0x28] sm:$0xff]
    %vm30 = vcmask 130048
    %v31 = vsel %vm30, %v24, -inf
    %32 = vmax.xlane.f32.xlu0 %v31
    %v33 = vpop.xlane.xlu0 %32
    %v34 = vsel %vm30, %v25, -inf
    %35 = vmax.xlane.f32.xlu0 %v34
    %v36 = vpop.xlane.xlu0 %35
    %v37 = vsel %vm30, %v26, -inf
    %38 = vmax.xlane.f32.xlu0 %v37
    %v39 = vpop.xlane.xlu0 %38
    %v40 = vsel %vm30, %v27, -inf
    %41 = vmax.xlane.f32.xlu0 %v40
    %v42 = vpop.xlane.xlu0 %41
    %v43 = vsel %vm30, %v28, -inf
    %44 = vmax.xlane.f32.xlu0 %v43
    %v45 = vpop.xlane.xlu0 %44
    %v46 = vsel %vm30, %v29, -inf
    %47 = vmax.xlane.f32.xlu0 %v46
    %v48 = vpop.xlane.xlu0 %47
    %v49 = vsub.f32 %v24, %v33
    %v50 = vsub.f32 %v25, %v36
    %v51 = vsub.f32 %v26, %v39
    %v52 = vsub.f32 %v27, %v42
    %v53 = vsub.f32 %v28, %v45
    %v54 = vsub.f32 %v29, %v48
    %v55 = vmul.f32 %v49, 1.442695
    %v56 = vpow.pop %v55
    %v57 = vmul.f32 %v50, 1.442695
    %v58 = vpow.pop %v57
    %v59 = vmul.f32 %v51, 1.442695
    %v60 = vpow.pop %v59
    %v61 = vmul.f32 %v52, 1.442695
    %v62 = vpow.pop %v61
    %v63 = vmul.f32 %v53, 1.442695
    %v64 = vpow.pop %v63
    %v65 = vmul.f32 %v54, 1.442695
    %v66 = vpow.pop %v65
    %v67 = vsel %vm30, %v56, 0.0
    %68 = vadd.xlane.f32.xlu0 %v67
    %v69 = vpop.xlane.xlu0 %68
    %v70 = vsel %vm30, %v58, 0.0
    %71 = vadd.xlane.f32.xlu0 %v70
    %v72 = vpop.xlane.xlu0 %71
    %v73 = vsel %vm30, %v60, 0.0
    %74 = vadd.xlane.f32.xlu0 %v73
    %v75 = vpop.xlane.xlu0 %74
    %v76 = vsel %vm30, %v62, 0.0
    %77 = vadd.xlane.f32.xlu0 %v76
    %v78 = vpop.xlane.xlu0 %77
    %v79 = vsel %vm30, %v64, 0.0
    %80 = vadd.xlane.f32.xlu0 %v79
    %v81 = vpop.xlane.xlu0 %80
    %v82 = vsel %vm30, %v66, 0.0
    %83 = vadd.xlane.f32.xlu0 %v82
    %v84 = vpop.xlane.xlu0 %83
    %v85 = vrcp.pop %v69
    %v86 = vrcp.pop %v72
    %v87 = vrcp.pop %v75
    %v88 = vrcp.pop %v78
    %v89 = vrcp.pop %v81
    %v90 = vrcp.pop %v84
    %v91 = vmul.f32 %v56, %v85
    %v92 = vmul.f32 %v58, %v86
    %v93 = vmul.f32 %v60, %v87
    %v94 = vmul.f32 %v62, %v88
    %v95 = vmul.f32 %v64, %v89
    %v96 = vmul.f32 %v66, %v90
    %v97 = vsel %vm30, %v91, 0.0
    %v98 = vsel %vm30, %v93, 0.0
    %v99 = vadd.f32 %v97, %v98
    %v100 = vsel %vm30, %v95, 0.0
    %v101 = vadd.f32 %v99, %v100
    %v102 = vsel %vm30, %v92, 0.0
    %v103 = vsel %vm30, %v94, 0.0
    %v104 = vadd.f32 %v102, %v103
    %v105 = vsel %vm30, %v96, 0.0
    %v106 = vadd.f32 %v104, %v105
    %v107 = vmul.f32 %v101, %v101
    %v108 = vmul.f32 %v106, %v106
    %v109 = vsel %vm30, %v107, 0.0
    %110 = vadd.xlane.f32.xlu0 %v109
    %v111 = vpop.xlane.xlu0 %110
    %v112 = vsel %vm30, %v108, 0.0
    %113 = vadd.xlane.f32.xlu0 %v112
    %v114 = vpop.xlane.xlu0 %113
    %v115 = vmul.f32 %v91, %v91
    %v116 = vmul.f32 %v92, %v92
    %v117 = vmul.f32 %v93, %v93
    %v118 = vmul.f32 %v94, %v94
    %v119 = vmul.f32 %v95, %v95
    %v120 = vmul.f32 %v96, %v96
    %v121 = vsel %vm30, %v115, 0.0
    %v122 = vsel %vm30, %v117, 0.0
    %v123 = vadd.f32 %v121, %v122
    %v124 = vsel %vm30, %v119, 0.0
    %v125 = vadd.f32 %v123, %v124
    %v126 = vsel %vm30, %v116, 0.0
    %v127 = vsel %vm30, %v118, 0.0
    %v128 = vadd.f32 %v126, %v127
    %v129 = vsel %vm30, %v120, 0.0
    %v130 = vadd.f32 %v128, %v129
    %v131 = vsel %vm30, %v125, 0.0
    %132 = vadd.xlane.f32.xlu0 %v131
    %v133 = vpop.xlane.xlu0 %132
    %v134 = vsel %vm30, %v130, 0.0
    %135 = vadd.xlane.f32.xlu0 %v134
    %v136 = vpop.xlane.xlu0 %135
    %v137 = vsub.f32 %v111, %v133
    %v138 = vsub.f32 %v114, %v136
    %v139 = vmul.f32 %v137, 0.5
    %v140 = vmul.f32 %v138, 0.5
    %vm141 = vcmask 7168
    %v142 = vsel %vm141, %v139, 0.0
    %v143 = vsel %vm141, %v140, 0.0
    %v144 = vadd.f32 %v142, %v143
    %145 = vadd.xlane.f32.xlu0 %v144
    %v146 = vpop.xlane.xlu0 %145
    %v147 = vrot.slane %v146, 4
    %v148 = vadd.f32 %v146, %v147
    %v149 = vrot.slane %v148, 2
    %v150 = vadd.f32 %v148, %v149
    %v151 = vrot.slane %v150, 1
    %v152 = vadd.f32 %v150, %v151
    %s153 = vtos %v152
    %v154 = vstv %s153
    %155 = vst [vmem:[%s1] sm:$0xff] %v154
    // Predicated region
    $region10: #{diversity_loss.1} parent=1 // pred_check
      _
    $region11: #{diversity_loss.1} parent=1 // pred_check_branch
      %157 = sbr.rel (0) target = $region13
    $region12: #{diversity_loss.1} parent=1 // pred_region
      _
    $region13: #{diversity_loss.1} parent=1 // pred_fallthru
      _
    // Predicated region
    $region14: #{diversity_loss.1} parent=1 // pred_check
      _
    $region15: #{diversity_loss.1} parent=1 // pred_check_branch
      %159 = sbr.rel (0) target = $region17
    $region16: #{diversity_loss.1} parent=1 // pred_region
      _
    $region17: #{diversity_loss.1} parent=1 // pred_fallthru
      _
    %160 = vsyncpa [#allocation3], 1

</llo_original>
